<compile_context>
chip_gen: v5e
topology: v5e:2x2
jax: 0.10.0
libtpu: 0.0.40
codegen_flags: <defaults>
</compile_context>

<pallas_src>
import functools

import jax
import jax.numpy as jnp
from jax import lax
from jax.experimental import pallas as pl
from jax.experimental.pallas import tpu as pltpu


_BN_EPS = 1e-5


def _round_up(n, m):
    return int(pl.cdiv(n, m) * m)


def _vmem_limit_bytes():
    cap = 64 * 1024 * 1024                      # conservative fallback (v7x)
    try:
        cap = int(getattr(pltpu.get_tpu_info(), "vmem_capacity_bytes", cap))
    except Exception:
        pass
    return max(32 * 1024 * 1024, min(cap * 3 // 4, 100 * 1024 * 1024))


_VMEM_LIMIT = _vmem_limit_bytes()
_WEIGHT_BUDGET = _VMEM_LIMIT // 3               # resident conv-weight stack


# ---------------------------------------------------------------------------
# Fused 3x3x3 conv + BN + (residual) + ReLU (+ fused 1x1x1 projection shortcut)
# ---------------------------------------------------------------------------
def _conv_plane_kernel(*refs, spatial, relu, has_res, has_proj):
    H, W = spatial
    Wp = W + 2
    P = (H + 2) * Wp

    x_refs = refs[0:3]                       # 3 depth-neighbour planes (P, Cin)
    w_ref, s_ref, t_ref, m_ref = refs[3:7]   # (27,Cin,tco), (1,tco)x2, (P,1)
    i = 7
    res_ref = None
    if has_res:
        res_ref = refs[i]
        i += 1
    if has_proj:
        wp_ref, ps_ref, pt_ref = refs[i], refs[i + 1], refs[i + 2]
        i += 3
    y_ref = refs[i]
    i += 1
    sc_ref = refs[i] if has_proj else None
    acc_ref = refs[-1]                       # (P, tco) f32 scratch

    acc_ref[...] = jnp.zeros_like(acc_ref)
    # 27 taps: depth via the three plane refs, (kh, kw) via static row offsets.
    for kd in range(3):
        for kh in range(3):
            for kw in range(3):
                s = (kh - 1) * Wp + (kw - 1)
                lo_d = max(0, -s)
                lo_s = max(0, s)
                sz = P - abs(s)
                acc_ref[lo_d:lo_d + sz, :] += jnp.dot(
                    x_refs[kd][lo_s:lo_s + sz, :],
                    w_ref[kd * 9 + kh * 3 + kw],
                    preferred_element_type=jnp.float32)

    y = acc_ref[...] * s_ref[...] + t_ref[...]
    if has_res:
        y = y + res_ref[...].astype(jnp.float32)
    if relu:
        y = jnp.maximum(y, 0.0)
    # mask keeps the (H, W) border rows exactly zero -> they act as the next
    # conv's spatial zero padding.
    y_ref[...] = (y * m_ref[...]).astype(y_ref.dtype)

    if has_proj:
        # 1x1x1 projection shortcut from the centre plane (already in VMEM).
        sc = jnp.dot(x_refs[1][...], wp_ref[...],
                     preferred_element_type=jnp.float32)
        sc = sc * ps_ref[...] + pt_ref[...]
        sc_ref[...] = (sc * m_ref[...]).astype(sc_ref.dtype)


def conv3x3x3_bn_act(hp, w_taps, scale, shift, mask, *, B, D, H, W,
                     relu=True, residual=None, proj=None,
                     out_dtype=jnp.bfloat16):
    """hp: (B, D+2, P, Cin) halo-padded planes; w_taps: (27, Cin, Cout)."""
    Cin = hp.shape[-1]
    Cout = w_taps.shape[-1]
    P = (H + 2) * (W + 2)
    assert hp.shape == (B, D + 2, P, Cin), hp.shape

    # Tile Cout only when the resident weight stack would blow the VMEM budget
    # (keeps layer3-sized stacks resident per tile, lane-dense >=128 outputs).
    tco = Cout
    while (27 * Cin * tco * 2 > _WEIGHT_BUDGET and tco % 2 == 0
           and (tco // 2) % 128 == 0):
        tco //= 2
    J = Cout // tco

    grid = (J, B, D)   # weights (indexed by j only) stay resident across (b, d)

    def plane_spec(kd):
        return pl.BlockSpec((None, None, P, Cin),
                            lambda j, b, d, kd=kd: (b, d + kd, 0, 0))

    in_specs = [plane_spec(0), plane_spec(1), plane_spec(2),
                pl.BlockSpec((27, Cin, tco), lambda j, b, d: (0, 0, j)),
                pl.BlockSpec((1, tco), lambda j, b, d: (0, j)),
                pl.BlockSpec((1, tco), lambda j, b, d: (0, j)),
                pl.BlockSpec((P, 1), lambda j, b, d: (0, 0))]
    args = [hp, hp, hp, w_taps,
            scale.reshape(1, Cout).astype(jnp.float32),
            shift.reshape(1, Cout).astype(jnp.float32),
            mask]

    if residual is not None:
        in_specs.append(pl.BlockSpec((None, None, P, tco),
                                     lambda j, b, d: (b, d, 0, j)))
        args.append(residual)
    if proj is not None:
        in_specs += [pl.BlockSpec((Cin, tco), lambda j, b, d: (0, j)),
                     pl.BlockSpec((1, tco), lambda j, b, d: (0, j)),
                     pl.BlockSpec((1, tco), lambda j, b, d: (0, j))]
        args += [proj["w"],
                 proj["scale"].reshape(1, Cout).astype(jnp.float32),
                 proj["shift"].reshape(1, Cout).astype(jnp.float32)]

    out_spec = pl.BlockSpec((None, None, P, tco), lambda j, b, d: (b, d, 0, j))
    y_shape = jax.ShapeDtypeStruct((B, D, P, Cout), out_dtype)
    if proj is not None:
        out_shape = (y_shape, jax.ShapeDtypeStruct((B, D, P, Cout), out_dtype))
        out_specs = (out_spec, out_spec)
    else:
        out_shape = y_shape
        out_specs = out_spec

    kernel = functools.partial(_conv_plane_kernel, spatial=(H, W), relu=relu,
                               has_res=residual is not None,
                               has_proj=proj is not None)

    return pl.pallas_call(
        kernel,
        out_shape=out_shape,
        grid_spec=pltpu.PrefetchScalarGridSpec(
            num_scalar_prefetch=0,
            grid=grid,
            in_specs=in_specs,
            out_specs=out_specs,
            scratch_shapes=[pltpu.VMEM((P, tco), jnp.float32)],
        ),
        compiler_params=pltpu.CompilerParams(
            # all-"arbitrary": near-zero measured impact vs "parallel" and no
            # ordering constraints; Cout tiles stay outermost so the weight
            # stack is fetched once per tile.
            dimension_semantics=("arbitrary", "arbitrary", "arbitrary"),
            vmem_limit_bytes=_VMEM_LIMIT,
        ),
    )(*args)


# ---------------------------------------------------------------------------
# Elementwise per-channel scale/shift (input BatchNorm, inference)
# ---------------------------------------------------------------------------
def _scale_shift_kernel(x_ref, s_ref, t_ref, o_ref):
    o_ref[...] = (x_ref[...].astype(jnp.float32) * s_ref[...]
                  + t_ref[...]).astype(o_ref.dtype)


def scale_shift(x, scale, shift, *, out_dtype=jnp.bfloat16, tm_max=1024):
    N, C = x.shape
    tm = tm_max if N >= tm_max else _round_up(N, 32)
    Npad = _round_up(N, tm)
    if Npad != N:
        x = jnp.pad(x, ((0, Npad - N), (0, 0)))
    out = pl.pallas_call(
        _scale_shift_kernel,
        out_shape=jax.ShapeDtypeStruct((Npad, C), out_dtype),
        grid_spec=pltpu.PrefetchScalarGridSpec(
            num_scalar_prefetch=0,
            grid=(Npad // tm,),
            in_specs=[pl.BlockSpec((tm, C), lambda i: (i, 0)),
                      pl.BlockSpec((1, C), lambda i: (0, 0)),
                      pl.BlockSpec((1, C), lambda i: (0, 0))],
            out_specs=pl.BlockSpec((tm, C), lambda i: (i, 0)),
        ),
        compiler_params=pltpu.CompilerParams(
            dimension_semantics=("arbitrary",),
            vmem_limit_bytes=_VMEM_LIMIT,
        ),
    )(x, scale.reshape(1, C).astype(jnp.float32),
      shift.reshape(1, C).astype(jnp.float32))
    return out[:N]


# ---------------------------------------------------------------------------
# Global spatial max pool: (B, Nvox, C) -> (B, C)
# ---------------------------------------------------------------------------
def _global_max_kernel(x_ref, o_ref, acc_ref):
    v = pl.program_id(1)

    @pl.when(v == 0)
    def _():
        acc_ref[...] = jnp.full_like(acc_ref, -jnp.inf)

    acc_ref[...] = jnp.maximum(
        acc_ref[...],
        jnp.max(x_ref[...].astype(jnp.float32), axis=0, keepdims=True))

    @pl.when(v == pl.num_programs(1) - 1)
    def _():
        o_ref[...] = acc_ref[...].astype(o_ref.dtype)


def global_max_pool(x, *, tv_max=2048):
    B, Nv, C = x.shape
    tv = tv_max if Nv >= tv_max else _round_up(Nv, 16)
    Nvp = _round_up(Nv, tv)
    if Nvp != Nv:
        x = jnp.pad(x, ((0, 0), (0, Nvp - Nv), (0, 0)),
                    constant_values=float(jnp.finfo(x.dtype).min))
    out = pl.pallas_call(
        _global_max_kernel,
        out_shape=jax.ShapeDtypeStruct((B, 1, C), x.dtype),
        grid_spec=pltpu.PrefetchScalarGridSpec(
            num_scalar_prefetch=0,
            grid=(B, Nvp // tv),
            in_specs=[pl.BlockSpec((None, tv, C), lambda b, v: (b, v, 0))],
            out_specs=pl.BlockSpec((None, 1, C), lambda b, v: (b, 0, 0)),
            scratch_shapes=[pltpu.VMEM((1, C), jnp.float32)],
        ),
        compiler_params=pltpu.CompilerParams(
            dimension_semantics=("parallel", "arbitrary"),
            vmem_limit_bytes=_VMEM_LIMIT,
        ),
    )(x)
    return out.reshape(B, C)


# ---------------------------------------------------------------------------
# Final FC
# ---------------------------------------------------------------------------
def _linear_kernel(x_ref, w_ref, b_ref, o_ref):
    o_ref[...] = (jnp.dot(x_ref[...], w_ref[...],
                          preferred_element_type=jnp.float32) + b_ref[...])


def linear(x, w, b):
    # TODO(synk): pad num_classes up to 128 lanes (or fold into the pooling
    # epilogue) to avoid masked stores; negligible at these sizes.
    B, K = x.shape
    _, N = w.shape
    return pl.pallas_call(
        _linear_kernel,
        out_shape=jax.ShapeDtypeStruct((B, N), jnp.float32),
        grid_spec=pltpu.PrefetchScalarGridSpec(
            num_scalar_prefetch=0,
            grid=(1,),
            in_specs=[pl.BlockSpec((B, K), lambda i: (0, 0)),
                      pl.BlockSpec((K, N), lambda i: (0, 0)),
                      pl.BlockSpec((1, N), lambda i: (0, 0))],
            out_specs=pl.BlockSpec((B, N), lambda i: (0, 0)),
        ),
        compiler_params=pltpu.CompilerParams(
            dimension_semantics=("arbitrary",),
            vmem_limit_bytes=_VMEM_LIMIT,
        ),
    )(x, w, b.reshape(1, N).astype(jnp.float32))


# ---------------------------------------------------------------------------
# Parameter helpers
# ---------------------------------------------------------------------------
def _conv_init(key, cout, cin, k):
    fan_in = cin * k ** 3
    bound = 1.0 / (fan_in ** 0.5)
    return jax.random.uniform(key, (cout, cin, k, k, k), jnp.float32,
                              -bound, bound)


def _bn_init(key, c):
    kg, kb, km, kv = jax.random.split(key, 4)
    gamma = jax.random.uniform(kg, (c,), jnp.float32, 0.5, 1.5)
    beta = 0.1 * jax.random.normal(kb, (c,), jnp.float32)
    mean = 0.1 * jax.random.normal(km, (c,), jnp.float32)
    var = jax.random.uniform(kv, (c,), jnp.float32, 0.5, 1.5)
    return gamma, beta, mean, var


def _bn_fold(gamma, beta, mean, var, eps=_BN_EPS):
    scale = gamma / jnp.sqrt(var + eps)
    shift = beta - mean * scale
    return scale, shift


def _weight_taps(w):
    """(Cout, Cin, 3, 3, 3) -> (27, Cin, Cout), tap-major (kd, kh, kw)."""
    cout, cin, kd, kh, kw = w.shape
    return jnp.transpose(w, (2, 3, 4, 1, 0)).reshape(kd * kh * kw, cin, cout)


# ---------------------------------------------------------------------------
# Model
# ---------------------------------------------------------------------------
class ResNet3DPallas:
    def __init__(self, layers, num_classes=20, in_channels=256, key=None):
        if key is None:
            key = jax.random.PRNGKey(1)
        self.in_channels = in_channels
        self.num_classes = num_classes

        key, k_bn0, k_fc = jax.random.split(key, 3)
        self.bn0 = _bn_init(k_bn0, in_channels)
        self.s0, self.t0 = _bn_fold(*self.bn0)

        self.blocks = []
        cin = in_channels
        for cout, nblk in zip(
                (in_channels, in_channels * 2, in_channels * 4), layers):
            for _ in range(nblk):
                key, kb = jax.random.split(key)
                self.blocks.append(self._make_block(kb, cin, cout))
                cin = cout

        c4 = in_channels * 4
        kfw, kfb = jax.random.split(k_fc)
        bound = 1.0 / (c4 ** 0.5)
        self.fc_w = jax.random.uniform(kfw, (num_classes, c4), jnp.float32,
                                       -bound, bound)
        self.fc_b = jax.random.uniform(kfb, (num_classes,), jnp.float32,
                                       -bound, bound)
        self.fc_wt = self.fc_w.T.astype(jnp.bfloat16)        # (c4, ncls)

    def _make_block(self, key, cin, cout):
        k1, k2, k3, k4, k5, k6 = jax.random.split(key, 6)
        w1 = _conv_init(k1, cout, cin, 3)
        bn1 = _bn_init(k2, cout)
        w2 = _conv_init(k3, cout, cout, 3)
        bn2 = _bn_init(k4, cout)
        s1, t1 = _bn_fold(*bn1)
        s2, t2 = _bn_fold(*bn2)
        if cin != cout:
            wp = _conv_init(k5, cout, cin, 1)
            bnp = _bn_init(k6, cout)
            sp, tp = _bn_fold(*bnp)
            proj = dict(w=wp, bn=bnp,
                        w2d=wp[:, :, 0, 0, 0].T.astype(jnp.bfloat16),
                        scale=sp, shift=tp)
        else:
            proj = None
        return dict(w1=w1, bn1=bn1, w2=w2, bn2=bn2, proj=proj,
                    w1_taps=_weight_taps(w1).astype(jnp.bfloat16),
                    w2_taps=_weight_taps(w2).astype(jnp.bfloat16),
                    s1=s1, t1=t1, s2=s2, t2=t2, cin=cin, cout=cout)

    def _apply_block(self, h, blk, B, D, H, W, mask):
        hp = jnp.pad(h, ((0, 0), (1, 1), (0, 0), (0, 0)))    # D halo only
        if blk["proj"] is not None:
            # conv1 + BN + ReLU with the 1x1x1 projection shortcut fused in.
            y, sc = conv3x3x3_bn_act(
                hp, blk["w1_taps"], blk["s1"], blk["t1"], mask,
                B=B, D=D, H=H, W=W, relu=True,
                proj=dict(w=blk["proj"]["w2d"], scale=blk["proj"]["scale"],
                          shift=blk["proj"]["shift"]))
        else:
            y = conv3x3x3_bn_act(hp, blk["w1_taps"], blk["s1"], blk["t1"],
                                 mask, B=B, D=D, H=H, W=W, relu=True)
            sc = h
        yp = jnp.pad(y, ((0, 0), (1, 1), (0, 0), (0, 0)))
        return conv3x3x3_bn_act(yp, blk["w2_taps"], blk["s2"], blk["t2"],
                                mask, B=B, D=D, H=H, W=W, relu=True,
                                residual=sc)

    def __call__(self, x):
        B, C, D, H, W = x.shape
        assert C == self.in_channels
        rows = jnp.transpose(x, (0, 2, 3, 4, 1)).reshape(B * D * H * W, C)
        h = scale_shift(rows, self.s0, self.t0)               # input BN -> bf16

        # Lay activations out as zero-bordered (H+2, W+2) planes flattened to
        # P rows; all convs keep this layout end to end (im2col fused in-kernel).
        h = jnp.pad(h.reshape(B, D, H, W, C),
                    ((0, 0), (0, 0), (1, 1), (1, 1), (0, 0)))
        P = (H + 2) * (W + 2)
        h = h.reshape(B, D, P, C)

        mask = jnp.pad(jnp.ones((H, W), jnp.float32),
                       ((1, 1), (1, 1))).reshape(P, 1)

        for blk in self.blocks:
            h = self._apply_block(h, blk, B, D, H, W, mask)

        c4 = h.shape[-1]
        # zero border rows never win the max (activations are post-ReLU >= 0).
        pooled = global_max_pool(h.reshape(B, D * P, c4))     # (B, c4)
        return linear(pooled, self.fc_wt, self.fc_b)          # (B, ncls) f32


# ---------------------------------------------------------------------------
# Pure-JAX reference (NCDHW, lax.conv) with the same bf16 quantization points.
# ---------------------------------------------------------------------------
def reference_forward(model, x):
    q = lambda a: a.astype(jnp.bfloat16).astype(jnp.float32)

    def bn_apply(y, bn):
        s, t = _bn_fold(*bn)
        return y * s[None, :, None, None, None] + t[None, :, None, None, None]

    def conv(y, w, pad):
        return lax.conv_general_dilated(
            y, q(w), window_strides=(1, 1, 1), padding=[(pad, pad)] * 3,
            dimension_numbers=("NCDHW", "OIDHW", "NCDHW"))

    h = q(bn_apply(x, model.bn0))
    for blk in model.blocks:
        y = q(jnp.maximum(bn_apply(conv(h, blk["w1"], 1), blk["bn1"]), 0.0))
        if blk["proj"] is not None:
            sc = q(bn_apply(conv(h, blk["proj"]["w"], 0), blk["proj"]["bn"]))
        else:
            sc = h
        h = q(jnp.maximum(bn_apply(conv(y, blk["w2"], 1), blk["bn2"]) + sc, 0.0))
    # F.max_pool3d(kernel_size=spatial, stride=3) on a cubic volume == global max
    pooled = jnp.max(h, axis=(2, 3, 4))
    return pooled @ q(model.fc_w.T) + model.fc_b


if __name__ == "__main__":
    # Small demo shapes: B=2, in_channels=16, 8^3 volume, layers=[1,1,1].
    B, C0, S = 2, 16, 8
    num_classes = 20

    key = jax.random.PRNGKey(0)
    key, kx = jax.random.split(key)
    x = jax.random.normal(kx, (B, C0, S, S, S), jnp.float32)

    model = ResNet3DPallas(layers=[1, 1, 1], num_classes=num_classes,
                           in_channels=C0, key=key)

    out = jax.block_until_ready(model(x))
    assert out.shape == (B, num_classes), out.shape

    ref = jax.block_until_ready(reference_forward(model, x))
    err = float(jnp.max(jnp.abs(out - ref)))
    assert jnp.allclose(out, ref, atol=5e-3, rtol=5e-3), err

    print("KERNEL_OK")
</pallas_src>

<mosaic_0001>
module attributes {stable_mosaic.version = 11 : i64} {
  func.func @_scale_shift_kernel(%arg0: i32, %arg1: memref<1024x16xf32, #tpu.memory_space<vmem>>, %arg2: memref<1x16xf32, #tpu.memory_space<vmem>>, %arg3: memref<1x16xf32, #tpu.memory_space<vmem>>, %arg4: memref<1024x16xbf16, #tpu.memory_space<vmem>>) attributes {dimension_semantics = [#tpu.dimension_semantics<arbitrary>], iteration_bounds = array<i64: 1>, scalar_prefetch = 0 : i64, scratch_operands = 0 : i64, tpu.core_type = #tpu.core_type<tc>, window_params = [{transform_indices = @transform_0, window_bounds = array<i64: 1024, 16>}, {pipeline_mode = #tpu.pipeline_mode<synchronous>, transform_indices = @transform_1, window_bounds = array<i64: 1, 16>}, {pipeline_mode = #tpu.pipeline_mode<synchronous>, transform_indices = @transform_2, window_bounds = array<i64: 1, 16>}, {transform_indices = @transform_3, window_bounds = array<i64: 1024, 16>}]} {
    %c0 = arith.constant 0 : index
    %c0_0 = arith.constant 0 : index
    %0 = vector.load %arg1[%c0, %c0_0] : memref<1024x16xf32, #tpu.memory_space<vmem>>, vector<1024x16xf32>
    %c0_1 = arith.constant 0 : index
    %c0_2 = arith.constant 0 : index
    %1 = vector.load %arg2[%c0_1, %c0_2] : memref<1x16xf32, #tpu.memory_space<vmem>>, vector<1x16xf32>
    %2 = vector.broadcast %1 : vector<1x16xf32> to vector<1024x16xf32>
    %3 = arith.mulf %0, %2 : vector<1024x16xf32>
    %c0_3 = arith.constant 0 : index
    %c0_4 = arith.constant 0 : index
    %4 = vector.load %arg3[%c0_3, %c0_4] : memref<1x16xf32, #tpu.memory_space<vmem>>, vector<1x16xf32>
    %5 = vector.broadcast %4 : vector<1x16xf32> to vector<1024x16xf32>
    %6 = arith.addf %3, %5 : vector<1024x16xf32>
    %7 = arith.truncf %6 : vector<1024x16xf32> to vector<1024x16xbf16>
    %c0_5 = arith.constant 0 : index
    %c0_6 = arith.constant 0 : index
    %8 = vector.load %arg4[%c0_5, %c0_6] : memref<1024x16xbf16, #tpu.memory_space<vmem>>, vector<1024x16xbf16>
    tpu.vector_store %arg4[%c0_5, %c0_6], %7 {strides = array<i32>} : memref<1024x16xbf16, #tpu.memory_space<vmem>>, vector<1024x16xbf16>,
    return
  }
  func.func @transform_0(%arg0: i32) -> (i32, i32) {
    %c0_i32 = arith.constant 0 : i32
    %c0_i32_0 = arith.constant 0 : i32
    return %arg0, %c0_i32 : i32, i32
  }
  func.func @transform_1(%arg0: i32) -> (i32, i32) {
    %c0_i32 = arith.constant 0 : i32
    %c0_i32_0 = arith.constant 0 : i32
    %c0_i32_1 = arith.constant 0 : i32
    return %c0_i32, %c0_i32_0 : i32, i32
  }
  func.func @transform_2(%arg0: i32) -> (i32, i32) {
    %c0_i32 = arith.constant 0 : i32
    %c0_i32_0 = arith.constant 0 : i32
    %c0_i32_1 = arith.constant 0 : i32
    return %c0_i32, %c0_i32_0 : i32, i32
  }
  func.func @transform_3(%arg0: i32) -> (i32, i32) {
    %c0_i32 = arith.constant 0 : i32
    %c0_i32_0 = arith.constant 0 : i32
    return %arg0, %c0_i32 : i32, i32
  }
}

</mosaic_0001>

<llo_original>
// kernel: tpu_custom_call.1
$region0: #{tpu_custom_call.1}
  #allocation0 [shape = 'u32[]', space=smem, size = 0x4, offset = 0x4, fixed_abs, tag = 'smem constant byte address 0x4 - core index']
  #allocation1 [shape = 'u32[72,128]{1,0:T(1,128)}', space=vmem, size = 0x9000, scoped, tag = 'internal scratch']
  %s0 = inlined_call_operand.vmem [shape: f32[1024,16], index: 0, kind: input, shape index: {}]
  %s1 = inlined_call_operand.vmem [shape: f32[1,16], index: 1, kind: input, shape index: {}]
  %s2 = inlined_call_operand.vmem [shape: f32[1,16], index: 2, kind: input, shape index: {}]
  %s3 = inlined_call_operand.vmem [shape: bf16[1024,16], index: 3, kind: output, shape index: {}]
  %s4 = sld [smem:[#allocation0]]
  $region22: #{tpu_custom_call.1} parent=0
    _
  %s6 = ssub.s32 1, %s4
  %s7 = scalar_select 0, %s6, %s4
  // Predicated region
  $region2: #{tpu_custom_call.1} parent=0 // pred_check
    _
  $region3: #{tpu_custom_call.1} parent=0 // pred_check_branch
    %9 = sbr.rel (0) target = $region5
  $region4: #{tpu_custom_call.1} parent=0 // pred_region
    _
  $region5: #{tpu_custom_call.1} parent=0 // pred_fallthru
    _
  // Predicated region
  $region6: #{tpu_custom_call.1} parent=0 // pred_check
    _
  $region7: #{tpu_custom_call.1} parent=0 // pred_check_branch
    %11 = sbr.rel (0) target = $region9
  $region8: #{tpu_custom_call.1} parent=0 // pred_region
    _
  $region9: #{tpu_custom_call.1} parent=0 // pred_fallthru
    _
  // Predicated region
  $region10: #{tpu_custom_call.1} parent=0 // pred_check
    _
  $region11: #{tpu_custom_call.1} parent=0 // pred_check_branch
    %13 = sbr.rel (0) target = $region13
  $region12: #{tpu_custom_call.1} parent=0 // pred_region
    _
  $region13: #{tpu_custom_call.1} parent=0 // pred_fallthru
    _
  %v14 = vld [vmem:[%s0] sm:$0xff]
  %v15 = vld [vmem:[%s0 + $0x8] sm:$0xff]
  %v16 = vld [vmem:[%s0 + $0x10] sm:$0xff]
  %v17 = vld [vmem:[%s0 + $0x18] sm:$0xff]
  %v18 = vld [vmem:[%s0 + $0x20] sm:$0xff]
  %v19 = vld [vmem:[%s0 + $0x28] sm:$0xff]
  %v20 = vld [vmem:[%s0 + $0x30] sm:$0xff]
  %v21 = vld [vmem:[%s0 + $0x38] sm:$0xff]
  %v22 = vld [vmem:[%s0 + $0x40] sm:$0xff]
  %v23 = vld [vmem:[%s0 + $0x48] sm:$0xff]
  %v24 = vld [vmem:[%s0 + $0x50] sm:$0xff]
  %v25 = vld [vmem:[%s0 + $0x58] sm:$0xff]
  %v26 = vld [vmem:[%s0 + $0x60] sm:$0xff]
  %v27 = vld [vmem:[%s0 + $0x68] sm:$0xff]
  %v28 = vld [vmem:[%s0 + $0x70] sm:$0xff]
  %v29 = vld [vmem:[%s0 + $0x78] sm:$0xff]
  %v30 = vld [vmem:[%s0 + $0x80] sm:$0xff]
  %v31 = vld [vmem:[%s0 + $0x88] sm:$0xff]
  %v32 = vld [vmem:[%s0 + $0x90] sm:$0xff]
  %v33 = vld [vmem:[%s0 + $0x98] sm:$0xff]
  %v34 = vld [vmem:[%s0 + $0xa0] sm:$0xff]
  %v35 = vld [vmem:[%s0 + $0xa8] sm:$0xff]
  %v36 = vld [vmem:[%s0 + $0xb0] sm:$0xff]
  %v37 = vld [vmem:[%s0 + $0xb8] sm:$0xff]
  %v38 = vld [vmem:[%s0 + $0xc0] sm:$0xff]
  %v39 = vld [vmem:[%s0 + $0xc8] sm:$0xff]
  %v40 = vld [vmem:[%s0 + $0xd0] sm:$0xff]
  %v41 = vld [vmem:[%s0 + $0xd8] sm:$0xff]
  %v42 = vld [vmem:[%s0 + $0xe0] sm:$0xff]
  %v43 = vld [vmem:[%s0 + $0xe8] sm:$0xff]
  %v44 = vld [vmem:[%s0 + $0xf0] sm:$0xff]
  %v45 = vld [vmem:[%s0 + $0xf8] sm:$0xff]
  %v46 = vld [vmem:[%s0 + $0x100] sm:$0xff]
  %v47 = vld [vmem:[%s0 + $0x108] sm:$0xff]
  %v48 = vld [vmem:[%s0 + $0x110] sm:$0xff]
  %v49 = vld [vmem:[%s0 + $0x118] sm:$0xff]
  %v50 = vld [vmem:[%s0 + $0x120] sm:$0xff]
  %v51 = vld [vmem:[%s0 + $0x128] sm:$0xff]
  %v52 = vld [vmem:[%s0 + $0x130] sm:$0xff]
  %v53 = vld [vmem:[%s0 + $0x138] sm:$0xff]
  %v54 = vld [vmem:[%s0 + $0x140] sm:$0xff]
  %v55 = vld [vmem:[%s0 + $0x148] sm:$0xff]
  %v56 = vld [vmem:[%s0 + $0x150] sm:$0xff]
  %v57 = vld [vmem:[%s0 + $0x158] sm:$0xff]
  %v58 = vld [vmem:[%s0 + $0x160] sm:$0xff]
  %v59 = vld [vmem:[%s0 + $0x168] sm:$0xff]
  %v60 = vld [vmem:[%s0 + $0x170] sm:$0xff]
  %v61 = vld [vmem:[%s0 + $0x178] sm:$0xff]
  %v62 = vld [vmem:[%s0 + $0x180] sm:$0xff]
  %v63 = vld [vmem:[%s0 + $0x188] sm:$0xff]
  %v64 = vld [vmem:[%s0 + $0x190] sm:$0xff]
  %v65 = vld [vmem:[%s0 + $0x198] sm:$0xff]
  %v66 = vld [vmem:[%s0 + $0x1a0] sm:$0xff]
  %v67 = vld [vmem:[%s0 + $0x1a8] sm:$0xff]
  %v68 = vld [vmem:[%s0 + $0x1b0] sm:$0xff]
  %v69 = vld [vmem:[%s0 + $0x1b8] sm:$0xff]
  %v70 = vld [vmem:[%s0 + $0x1c0] sm:$0xff]
  %v71 = vld [vmem:[%s0 + $0x1c8] sm:$0xff]
  %v72 = vld [vmem:[%s0 + $0x1d0] sm:$0xff]
  %v73 = vld [vmem:[%s0 + $0x1d8] sm:$0xff]
  %v74 = vld [vmem:[%s0 + $0x1e0] sm:$0xff]
  %v75 = vld [vmem:[%s0 + $0x1e8] sm:$0xff]
  %v76 = vld [vmem:[%s0 + $0x1f0] sm:$0xff]
  %v77 = vld [vmem:[%s0 + $0x1f8] sm:$0xff]
  %v78 = vld [vmem:[%s0 + $0x200] sm:$0xff]
  %v79 = vld [vmem:[%s0 + $0x208] sm:$0xff]
  %v80 = vld [vmem:[%s0 + $0x210] sm:$0xff]
  %v81 = vld [vmem:[%s0 + $0x218] sm:$0xff]
  %v82 = vld [vmem:[%s0 + $0x220] sm:$0xff]
  %v83 = vld [vmem:[%s0 + $0x228] sm:$0xff]
  %v84 = vld [vmem:[%s0 + $0x230] sm:$0xff]
  %v85 = vld [vmem:[%s0 + $0x238] sm:$0xff]
  %v86 = vld [vmem:[%s0 + $0x240] sm:$0xff]
  %v87 = vld [vmem:[%s0 + $0x248] sm:$0xff]
  %v88 = vld [vmem:[%s0 + $0x250] sm:$0xff]
  %v89 = vld [vmem:[%s0 + $0x258] sm:$0xff]
  %v90 = vld [vmem:[%s0 + $0x260] sm:$0xff]
  %v91 = vld [vmem:[%s0 + $0x268] sm:$0xff]
  %v92 = vld [vmem:[%s0 + $0x270] sm:$0xff]
  %v93 = vld [vmem:[%s0 + $0x278] sm:$0xff]
  %v94 = vld [vmem:[%s0 + $0x280] sm:$0xff]
  %v95 = vld [vmem:[%s0 + $0x288] sm:$0xff]
  %v96 = vld [vmem:[%s0 + $0x290] sm:$0xff]
  %v97 = vld [vmem:[%s0 + $0x298] sm:$0xff]
  %v98 = vld [vmem:[%s0 + $0x2a0] sm:$0xff]
  %v99 = vld [vmem:[%s0 + $0x2a8] sm:$0xff]
  %v100 = vld [vmem:[%s0 + $0x2b0] sm:$0xff]
  %v101 = vld [vmem:[%s0 + $0x2b8] sm:$0xff]
  %v102 = vld [vmem:[%s0 + $0x2c0] sm:$0xff]
  %v103 = vld [vmem:[%s0 + $0x2c8] sm:$0xff]
  %v104 = vld [vmem:[%s0 + $0x2d0] sm:$0xff]
  %v105 = vld [vmem:[%s0 + $0x2d8] sm:$0xff]
  %v106 = vld [vmem:[%s0 + $0x2e0] sm:$0xff]
  %v107 = vld [vmem:[%s0 + $0x2e8] sm:$0xff]
  %v108 = vld [vmem:[%s0 + $0x2f0] sm:$0xff]
  %v109 = vld [vmem:[%s0 + $0x2f8] sm:$0xff]
  %v110 = vld [vmem:[%s0 + $0x300] sm:$0xff]
  %v111 = vld [vmem:[%s0 + $0x308] sm:$0xff]
  %v112 = vld [vmem:[%s0 + $0x310] sm:$0xff]
  %v113 = vld [vmem:[%s0 + $0x318] sm:$0xff]
  %v114 = vld [vmem:[%s0 + $0x320] sm:$0xff]
  %v115 = vld [vmem:[%s0 + $0x328] sm:$0xff]
  %v116 = vld [vmem:[%s0 + $0x330] sm:$0xff]
  %v117 = vld [vmem:[%s0 + $0x338] sm:$0xff]
  %v118 = vld [vmem:[%s0 + $0x340] sm:$0xff]
  %v119 = vld [vmem:[%s0 + $0x348] sm:$0xff]
  %v120 = vld [vmem:[%s0 + $0x350] sm:$0xff]
  %v121 = vld [vmem:[%s0 + $0x358] sm:$0xff]
  %v122 = vld [vmem:[%s0 + $0x360] sm:$0xff]
  %v123 = vld [vmem:[%s0 + $0x368] sm:$0xff]
  %v124 = vld [vmem:[%s0 + $0x370] sm:$0xff]
  %v125 = vld [vmem:[%s0 + $0x378] sm:$0xff]
  %v126 = vld [vmem:[%s0 + $0x380] sm:$0xff]
  %v127 = vld [vmem:[%s0 + $0x388] sm:$0xff]
  %v128 = vld [vmem:[%s0 + $0x390] sm:$0xff]
  %v129 = vld [vmem:[%s0 + $0x398] sm:$0xff]
  %v130 = vld [vmem:[%s0 + $0x3a0] sm:$0xff]
  %v131 = vld [vmem:[%s0 + $0x3a8] sm:$0xff]
  %v132 = vld [vmem:[%s0 + $0x3b0] sm:$0xff]
  %v133 = vld [vmem:[%s0 + $0x3b8] sm:$0xff]
  %v134 = vld [vmem:[%s0 + $0x3c0] sm:$0xff]
  %v135 = vld [vmem:[%s0 + $0x3c8] sm:$0xff]
  %v136 = vld [vmem:[%s0 + $0x3d0] sm:$0xff]
  %v137 = vld [vmem:[%s0 + $0x3d8] sm:$0xff]
  %v138 = vld [vmem:[%s0 + $0x3e0] sm:$0xff]
  %v139 = vld [vmem:[%s0 + $0x3e8] sm:$0xff]
  %v140 = vld [vmem:[%s0 + $0x3f0] sm:$0xff]
  %v141 = vld [vmem:[%s0 + $0x3f8] sm:$0xff]
  %v142 = vld [vmem:[%s1] sm:$0x1]
  %v144 = vperm.slane %v142, 0
  %v146 = vmul.f32 %v14, %v144
  %v147 = vmul.f32 %v15, %v144
  %v148 = vmul.f32 %v16, %v144
  %v149 = vmul.f32 %v17, %v144
  %v150 = vmul.f32 %v18, %v144
  %v151 = vmul.f32 %v19, %v144
  %v152 = vmul.f32 %v20, %v144
  %v153 = vmul.f32 %v21, %v144
  %v154 = vmul.f32 %v22, %v144
  %v155 = vmul.f32 %v23, %v144
  %v156 = vmul.f32 %v24, %v144
  %v157 = vmul.f32 %v25, %v144
  %v158 = vmul.f32 %v26, %v144
  %v159 = vmul.f32 %v27, %v144
  %v160 = vmul.f32 %v28, %v144
  %v161 = vmul.f32 %v29, %v144
  %v162 = vmul.f32 %v30, %v144
  %v163 = vmul.f32 %v31, %v144
  %v164 = vmul.f32 %v32, %v144
  %v165 = vmul.f32 %v33, %v144
  %v166 = vmul.f32 %v34, %v144
  %v167 = vmul.f32 %v35, %v144
  %v168 = vmul.f32 %v36, %v144
  %v169 = vmul.f32 %v37, %v144
  %v170 = vmul.f32 %v38, %v144
  %v171 = vmul.f32 %v39, %v144
  %v172 = vmul.f32 %v40, %v144
  %v173 = vmul.f32 %v41, %v144
  %v174 = vmul.f32 %v42, %v144
  %v175 = vmul.f32 %v43, %v144
  %v176 = vmul.f32 %v44, %v144
  %v177 = vmul.f32 %v45, %v144
  %v178 = vmul.f32 %v46, %v144
  %v179 = vmul.f32 %v47, %v144
  %v180 = vmul.f32 %v48, %v144
  %v181 = vmul.f32 %v49, %v144
  %v182 = vmul.f32 %v50, %v144
  %v183 = vmul.f32 %v51, %v144
  %v184 = vmul.f32 %v52, %v144
  %v185 = vmul.f32 %v53, %v144
  %v186 = vmul.f32 %v54, %v144
  %v187 = vmul.f32 %v55, %v144
  %v188 = vmul.f32 %v56, %v144
  %v189 = vmul.f32 %v57, %v144
  %v190 = vmul.f32 %v58, %v144
  %v191 = vmul.f32 %v59, %v144
  %v192 = vmul.f32 %v60, %v144
  %v193 = vmul.f32 %v61, %v144
  %v194 = vmul.f32 %v62, %v144
  %v195 = vmul.f32 %v63, %v144
  %v196 = vmul.f32 %v64, %v144
  %v197 = vmul.f32 %v65, %v144
  %v198 = vmul.f32 %v66, %v144
  %v199 = vmul.f32 %v67, %v144
  %v200 = vmul.f32 %v68, %v144
  %v201 = vmul.f32 %v69, %v144
  %v202 = vmul.f32 %v70, %v144
  %v203 = vmul.f32 %v71, %v144
  %v204 = vmul.f32 %v72, %v144
  %v205 = vmul.f32 %v73, %v144
  %v206 = vmul.f32 %v74, %v144
  %v207 = vmul.f32 %v75, %v144
  %v208 = vmul.f32 %v76, %v144
  %v209 = vmul.f32 %v77, %v144
  %v210 = vmul.f32 %v78, %v144
  %v211 = vmul.f32 %v79, %v144
  %v212 = vmul.f32 %v80, %v144
  %v213 = vmul.f32 %v81, %v144
  %v214 = vmul.f32 %v82, %v144
  %v215 = vmul.f32 %v83, %v144
  %v216 = vmul.f32 %v84, %v144
  %v217 = vmul.f32 %v85, %v144
  %v218 = vmul.f32 %v86, %v144
  %v219 = vmul.f32 %v87, %v144
  %v220 = vmul.f32 %v88, %v144
  %v221 = vmul.f32 %v89, %v144
  %v222 = vmul.f32 %v90, %v144
  %v223 = vmul.f32 %v91, %v144
  %v224 = vmul.f32 %v92, %v144
  %v225 = vmul.f32 %v93, %v144
  %v226 = vmul.f32 %v94, %v144
  %v227 = vmul.f32 %v95, %v144
  %v228 = vmul.f32 %v96, %v144
  %v229 = vmul.f32 %v97, %v144
  %v230 = vmul.f32 %v98, %v144
  %v231 = vmul.f32 %v99, %v144
  %v232 = vmul.f32 %v100, %v144
  %v233 = vmul.f32 %v101, %v144
  %v234 = vmul.f32 %v102, %v144
  %v235 = vmul.f32 %v103, %v144
  %v236 = vmul.f32 %v104, %v144
  %v237 = vmul.f32 %v105, %v144
  %v238 = vmul.f32 %v106, %v144
  %v239 = vmul.f32 %v107, %v144
  %v240 = vmul.f32 %v108, %v144
  %v241 = vmul.f32 %v109, %v144
  %v242 = vmul.f32 %v110, %v144
  %v243 = vmul.f32 %v111, %v144
  %v244 = vmul.f32 %v112, %v144
  %v245 = vmul.f32 %v113, %v144
  %v246 = vmul.f32 %v114, %v144
  %v247 = vmul.f32 %v115, %v144
  %v248 = vmul.f32 %v116, %v144
  %v249 = vmul.f32 %v117, %v144
  %v250 = vmul.f32 %v118, %v144
  %v251 = vmul.f32 %v119, %v144
  %v252 = vmul.f32 %v120, %v144
  %v253 = vmul.f32 %v121, %v144
  %v254 = vmul.f32 %v122, %v144
  %v255 = vmul.f32 %v123, %v144
  %v256 = vmul.f32 %v124, %v144
  %v257 = vmul.f32 %v125, %v144
  %v258 = vmul.f32 %v126, %v144
  %v259 = vmul.f32 %v127, %v144
  %v260 = vmul.f32 %v128, %v144
  %v261 = vmul.f32 %v129, %v144
  %v262 = vmul.f32 %v130, %v144
  %v263 = vmul.f32 %v131, %v144
  %v264 = vmul.f32 %v132, %v144
  %v265 = vmul.f32 %v133, %v144
  %v266 = vmul.f32 %v134, %v144
  %v267 = vmul.f32 %v135, %v144
  %v268 = vmul.f32 %v136, %v144
  %v269 = vmul.f32 %v137, %v144
  %v270 = vmul.f32 %v138, %v144
  %v271 = vmul.f32 %v139, %v144
  %v272 = vmul.f32 %v140, %v144
  %v273 = vmul.f32 %v141, %v144
  %v274 = vld [vmem:[%s2] sm:$0x1]
  %v276 = vperm.slane %v274, 0
  %v278 = vadd.f32 %v146, %v276
  %v279 = vadd.f32 %v147, %v276
  %v280 = vadd.f32 %v148, %v276
  %v281 = vadd.f32 %v149, %v276
  %v282 = vadd.f32 %v150, %v276
  %v283 = vadd.f32 %v151, %v276
  %v284 = vadd.f32 %v152, %v276
  %v285 = vadd.f32 %v153, %v276
  %v286 = vadd.f32 %v154, %v276
  %v287 = vadd.f32 %v155, %v276
  %v288 = vadd.f32 %v156, %v276
  %v289 = vadd.f32 %v157, %v276
  %v290 = vadd.f32 %v158, %v276
  %v291 = vadd.f32 %v159, %v276
  %v292 = vadd.f32 %v160, %v276
  %v293 = vadd.f32 %v161, %v276
  %v294 = vadd.f32 %v162, %v276
  %v295 = vadd.f32 %v163, %v276
  %v296 = vadd.f32 %v164, %v276
  %v297 = vadd.f32 %v165, %v276
  %v298 = vadd.f32 %v166, %v276
  %v299 = vadd.f32 %v167, %v276
  %v300 = vadd.f32 %v168, %v276
  %v301 = vadd.f32 %v169, %v276
  %v302 = vadd.f32 %v170, %v276
  %v303 = vadd.f32 %v171, %v276
  %v304 = vadd.f32 %v172, %v276
  %v305 = vadd.f32 %v173, %v276
  %v306 = vadd.f32 %v174, %v276
  %v307 = vadd.f32 %v175, %v276
  %v308 = vadd.f32 %v176, %v276
  %v309 = vadd.f32 %v177, %v276
  %v310 = vadd.f32 %v178, %v276
  %v311 = vadd.f32 %v179, %v276
  %v312 = vadd.f32 %v180, %v276
  %v313 = vadd.f32 %v181, %v276
  %v314 = vadd.f32 %v182, %v276
  %v315 = vadd.f32 %v183, %v276
  %v316 = vadd.f32 %v184, %v276
  %v317 = vadd.f32 %v185, %v276
  %v318 = vadd.f32 %v186, %v276
  %v319 = vadd.f32 %v187, %v276
  %v320 = vadd.f32 %v188, %v276
  %v321 = vadd.f32 %v189, %v276
  %v322 = vadd.f32 %v190, %v276
  %v323 = vadd.f32 %v191, %v276
  %v324 = vadd.f32 %v192, %v276
  %v325 = vadd.f32 %v193, %v276
  %v326 = vadd.f32 %v194, %v276
  %v327 = vadd.f32 %v195, %v276
  %v328 = vadd.f32 %v196, %v276
  %v329 = vadd.f32 %v197, %v276
  %v330 = vadd.f32 %v198, %v276
  %v331 = vadd.f32 %v199, %v276
  %v332 = vadd.f32 %v200, %v276
  %v333 = vadd.f32 %v201, %v276
  %v334 = vadd.f32 %v202, %v276
  %v335 = vadd.f32 %v203, %v276
  %v336 = vadd.f32 %v204, %v276
  %v337 = vadd.f32 %v205, %v276
  %v338 = vadd.f32 %v206, %v276
  %v339 = vadd.f32 %v207, %v276
  %v340 = vadd.f32 %v208, %v276
  %v341 = vadd.f32 %v209, %v276
  %v342 = vadd.f32 %v210, %v276
  %v343 = vadd.f32 %v211, %v276
  %v344 = vadd.f32 %v212, %v276
  %v345 = vadd.f32 %v213, %v276
  %v346 = vadd.f32 %v214, %v276
  %v347 = vadd.f32 %v215, %v276
  %v348 = vadd.f32 %v216, %v276
  %v349 = vadd.f32 %v217, %v276
  %v350 = vadd.f32 %v218, %v276
  %v351 = vadd.f32 %v219, %v276
  %v352 = vadd.f32 %v220, %v276
  %v353 = vadd.f32 %v221, %v276
  %v354 = vadd.f32 %v222, %v276
  %v355 = vadd.f32 %v223, %v276
  %v356 = vadd.f32 %v224, %v276
  %v357 = vadd.f32 %v225, %v276
  %v358 = vadd.f32 %v226, %v276
  %v359 = vadd.f32 %v227, %v276
  %v360 = vadd.f32 %v228, %v276
  %v361 = vadd.f32 %v229, %v276
  %v362 = vadd.f32 %v230, %v276
  %v363 = vadd.f32 %v231, %v276
  %v364 = vadd.f32 %v232, %v276
  %v365 = vadd.f32 %v233, %v276
  %v366 = vadd.f32 %v234, %v276
  %v367 = vadd.f32 %v235, %v276
  %v368 = vadd.f32 %v236, %v276
  %v369 = vadd.f32 %v237, %v276
  %v370 = vadd.f32 %v238, %v276
  %v371 = vadd.f32 %v239, %v276
  %v372 = vadd.f32 %v240, %v276
  %v373 = vadd.f32 %v241, %v276
  %v374 = vadd.f32 %v242, %v276
  %v375 = vadd.f32 %v243, %v276
  %v376 = vadd.f32 %v244, %v276
  %v377 = vadd.f32 %v245, %v276
  %v378 = vadd.f32 %v246, %v276
  %v379 = vadd.f32 %v247, %v276
  %v380 = vadd.f32 %v248, %v276
  %v381 = vadd.f32 %v249, %v276
  %v382 = vadd.f32 %v250, %v276
  %v383 = vadd.f32 %v251, %v276
  %v384 = vadd.f32 %v252, %v276
  %v385 = vadd.f32 %v253, %v276
  %v386 = vadd.f32 %v254, %v276
  %v387 = vadd.f32 %v255, %v276
  %v388 = vadd.f32 %v256, %v276
  %v389 = vadd.f32 %v257, %v276
  %v390 = vadd.f32 %v258, %v276
  %v391 = vadd.f32 %v259, %v276
  %v392 = vadd.f32 %v260, %v276
  %v393 = vadd.f32 %v261, %v276
  %v394 = vadd.f32 %v262, %v276
  %v395 = vadd.f32 %v263, %v276
  %v396 = vadd.f32 %v264, %v276
  %v397 = vadd.f32 %v265, %v276
  %v398 = vadd.f32 %v266, %v276
  %v399 = vadd.f32 %v267, %v276
  %v400 = vadd.f32 %v268, %v276
  %v401 = vadd.f32 %v269, %v276
  %v402 = vadd.f32 %v270, %v276
  %v403 = vadd.f32 %v271, %v276
  %v404 = vadd.f32 %v272, %v276
  %v405 = vadd.f32 %v273, %v276
  %v406 = vpack.c.bf16 %v278, %v278
  %v407 = vpack.c.bf16 %v279, %v279
  %v408 = vpack.c.bf16 %v280, %v280
  %v409 = vpack.c.bf16 %v281, %v281
  %v410 = vpack.c.bf16 %v282, %v282
  %v411 = vpack.c.bf16 %v283, %v283
  %v412 = vpack.c.bf16 %v284, %v284
  %v413 = vpack.c.bf16 %v285, %v285
  %v414 = vpack.c.bf16 %v286, %v286
  %v415 = vpack.c.bf16 %v287, %v287
  %v416 = vpack.c.bf16 %v288, %v288
  %v417 = vpack.c.bf16 %v289, %v289
  %v418 = vpack.c.bf16 %v290, %v290
  %v419 = vpack.c.bf16 %v291, %v291
  %v420 = vpack.c.bf16 %v292, %v292
  %v421 = vpack.c.bf16 %v293, %v293
  %v422 = vpack.c.bf16 %v294, %v294
  %v423 = vpack.c.bf16 %v295, %v295
  %v424 = vpack.c.bf16 %v296, %v296
  %v425 = vpack.c.bf16 %v297, %v297
  %v426 = vpack.c.bf16 %v298, %v298
  %v427 = vpack.c.bf16 %v299, %v299
  %v428 = vpack.c.bf16 %v300, %v300
  %v429 = vpack.c.bf16 %v301, %v301
  %v430 = vpack.c.bf16 %v302, %v302
  %v431 = vpack.c.bf16 %v303, %v303
  %v432 = vpack.c.bf16 %v304, %v304
  %v433 = vpack.c.bf16 %v305, %v305
  %v434 = vpack.c.bf16 %v306, %v306
  %v435 = vpack.c.bf16 %v307, %v307
  %v436 = vpack.c.bf16 %v308, %v308
  %v437 = vpack.c.bf16 %v309, %v309
  %v438 = vpack.c.bf16 %v310, %v310
  %v439 = vpack.c.bf16 %v311, %v311
  %v440 = vpack.c.bf16 %v312, %v312
  %v441 = vpack.c.bf16 %v313, %v313
  %v442 = vpack.c.bf16 %v314, %v314
  %v443 = vpack.c.bf16 %v315, %v315
  %v444 = vpack.c.bf16 %v316, %v316
  %v445 = vpack.c.bf16 %v317, %v317
  %v446 = vpack.c.bf16 %v318, %v318
  %v447 = vpack.c.bf16 %v319, %v319
  %v448 = vpack.c.bf16 %v320, %v320
  %v449 = vpack.c.bf16 %v321, %v321
  %v450 = vpack.c.bf16 %v322, %v322
  %v451 = vpack.c.bf16 %v323, %v323
  %v452 = vpack.c.bf16 %v324, %v324
  %v453 = vpack.c.bf16 %v325, %v325
  %v454 = vpack.c.bf16 %v326, %v326
  %v455 = vpack.c.bf16 %v327, %v327
  %v456 = vpack.c.bf16 %v328, %v328
  %v457 = vpack.c.bf16 %v329, %v329
  %v458 = vpack.c.bf16 %v330, %v330
  %v459 = vpack.c.bf16 %v331, %v331
  %v460 = vpack.c.bf16 %v332, %v332
  %v461 = vpack.c.bf16 %v333, %v333
  %v462 = vpack.c.bf16 %v334, %v334
  %v463 = vpack.c.bf16 %v335, %v335
  %v464 = vpack.c.bf16 %v336, %v336
  %v465 = vpack.c.bf16 %v337, %v337
  %v466 = vpack.c.bf16 %v338, %v338
  %v467 = vpack.c.bf16 %v339, %v339
  %v468 = vpack.c.bf16 %v340, %v340
  %v469 = vpack.c.bf16 %v341, %v341
  %v470 = vpack.c.bf16 %v342, %v342
  %v471 = vpack.c.bf16 %v343, %v343
  %v472 = vpack.c.bf16 %v344, %v344
  %v473 = vpack.c.bf16 %v345, %v345
  %v474 = vpack.c.bf16 %v346, %v346
  %v475 = vpack.c.bf16 %v347, %v347
  %v476 = vpack.c.bf16 %v348, %v348
  %v477 = vpack.c.bf16 %v349, %v349
  %v478 = vpack.c.bf16 %v350, %v350
  %v479 = vpack.c.bf16 %v351, %v351
  %v480 = vpack.c.bf16 %v352, %v352
  %v481 = vpack.c.bf16 %v353, %v353
  %v482 = vpack.c.bf16 %v354, %v354
  %v483 = vpack.c.bf16 %v355, %v355
  %v484 = vpack.c.bf16 %v356, %v356
  %v485 = vpack.c.bf16 %v357, %v357
  %v486 = vpack.c.bf16 %v358, %v358
  %v487 = vpack.c.bf16 %v359, %v359
  %v488 = vpack.c.bf16 %v360, %v360
  %v489 = vpack.c.bf16 %v361, %v361
  %v490 = vpack.c.bf16 %v362, %v362
  %v491 = vpack.c.bf16 %v363, %v363
  %v492 = vpack.c.bf16 %v364, %v364
  %v493 = vpack.c.bf16 %v365, %v365
  %v494 = vpack.c.bf16 %v366, %v366
  %v495 = vpack.c.bf16 %v367, %v367
  %v496 = vpack.c.bf16 %v368, %v368
  %v497 = vpack.c.bf16 %v369, %v369
  %v498 = vpack.c.bf16 %v370, %v370
  %v499 = vpack.c.bf16 %v371, %v371
  %v500 = vpack.c.bf16 %v372, %v372
  %v501 = vpack.c.bf16 %v373, %v373
  %v502 = vpack.c.bf16 %v374, %v374
  %v503 = vpack.c.bf16 %v375, %v375
  %v504 = vpack.c.bf16 %v376, %v376
  %v505 = vpack.c.bf16 %v377, %v377
  %v506 = vpack.c.bf16 %v378, %v378
  %v507 = vpack.c.bf16 %v379, %v379
  %v508 = vpack.c.bf16 %v380, %v380
  %v509 = vpack.c.bf16 %v381, %v381
  %v510 = vpack.c.bf16 %v382, %v382
  %v511 = vpack.c.bf16 %v383, %v383
  %v512 = vpack.c.bf16 %v384, %v384
  %v513 = vpack.c.bf16 %v385, %v385
  %v514 = vpack.c.bf16 %v386, %v386
  %v515 = vpack.c.bf16 %v387, %v387
  %v516 = vpack.c.bf16 %v388, %v388
  %v517 = vpack.c.bf16 %v389, %v389
  %v518 = vpack.c.bf16 %v390, %v390
  %v519 = vpack.c.bf16 %v391, %v391
  %v520 = vpack.c.bf16 %v392, %v392
  %v521 = vpack.c.bf16 %v393, %v393
  %v522 = vpack.c.bf16 %v394, %v394
  %v523 = vpack.c.bf16 %v395, %v395
  %v524 = vpack.c.bf16 %v396, %v396
  %v525 = vpack.c.bf16 %v397, %v397
  %v526 = vpack.c.bf16 %v398, %v398
  %v527 = vpack.c.bf16 %v399, %v399
  %v528 = vpack.c.bf16 %v400, %v400
  %v529 = vpack.c.bf16 %v401, %v401
  %v530 = vpack.c.bf16 %v402, %v402
  %v531 = vpack.c.bf16 %v403, %v403
  %v532 = vpack.c.bf16 %v404, %v404
  %v533 = vpack.c.bf16 %v405, %v405
  %vm534 = vcmask 125952
  %535 = vst.msk [vmem:[%s3] sm:$0xf] %vm534, %v406
  %536 = vst.msk [vmem:[%s3 + $0x4] sm:$0xf] %vm534, %v407
  %537 = vst.msk [vmem:[%s3 + $0x8] sm:$0xf] %vm534, %v408
  %538 = vst.msk [vmem:[%s3 + $0xc] sm:$0xf] %vm534, %v409
  %539 = vst.msk [vmem:[%s3 + $0x10] sm:$0xf] %vm534, %v410
  %540 = vst.msk [vmem:[%s3 + $0x14] sm:$0xf] %vm534, %v411
  %541 = vst.msk [vmem:[%s3 + $0x18] sm:$0xf] %vm534, %v412
  %542 = vst.msk [vmem:[%s3 + $0x1c] sm:$0xf] %vm534, %v413
  %543 = vst.msk [vmem:[%s3 + $0x20] sm:$0xf] %vm534, %v414
  %544 = vst.msk [vmem:[%s3 + $0x24] sm:$0xf] %vm534, %v415
  %545 = vst.msk [vmem:[%s3 + $0x28] sm:$0xf] %vm534, %v416
  %546 = vst.msk [vmem:[%s3 + $0x2c] sm:$0xf] %vm534, %v417
  %547 = vst.msk [vmem:[%s3 + $0x30] sm:$0xf] %vm534, %v418
  %548 = vst.msk [vmem:[%s3 + $0x34] sm:$0xf] %vm534, %v419
  %549 = vst.msk [vmem:[%s3 + $0x38] sm:$0xf] %vm534, %v420
  %550 = vst.msk [vmem:[%s3 + $0x3c] sm:$0xf] %vm534, %v421
  %551 = vst.msk [vmem:[%s3 + $0x40] sm:$0xf] %vm534, %v422
  %552 = vst.msk [vmem:[%s3 + $0x44] sm:$0xf] %vm534, %v423
  %553 = vst.msk [vmem:[%s3 + $0x48] sm:$0xf] %vm534, %v424
  %554 = vst.msk [vmem:[%s3 + $0x4c] sm:$0xf] %vm534, %v425
  %555 = vst.msk [vmem:[%s3 + $0x50] sm:$0xf] %vm534, %v426
  %556 = vst.msk [vmem:[%s3 + $0x54] sm:$0xf] %vm534, %v427
  %557 = vst.msk [vmem:[%s3 + $0x58] sm:$0xf] %vm534, %v428
  %558 = vst.msk [vmem:[%s3 + $0x5c] sm:$0xf] %vm534, %v429
  %559 = vst.msk [vmem:[%s3 + $0x60] sm:$0xf] %vm534, %v430
  %560 = vst.msk [vmem:[%s3 + $0x64] sm:$0xf] %vm534, %v431
  %561 = vst.msk [vmem:[%s3 + $0x68] sm:$0xf] %vm534, %v432
  %562 = vst.msk [vmem:[%s3 + $0x6c] sm:$0xf] %vm534, %v433
  %563 = vst.msk [vmem:[%s3 + $0x70] sm:$0xf] %vm534, %v434
  %564 = vst.msk [vmem:[%s3 + $0x74] sm:$0xf] %vm534, %v435
  %565 = vst.msk [vmem:[%s3 + $0x78] sm:$0xf] %vm534, %v436
  %566 = vst.msk [vmem:[%s3 + $0x7c] sm:$0xf] %vm534, %v437
  %567 = vst.msk [vmem:[%s3 + $0x80] sm:$0xf] %vm534, %v438
  %568 = vst.msk [vmem:[%s3 + $0x84] sm:$0xf] %vm534, %v439
  %569 = vst.msk [vmem:[%s3 + $0x88] sm:$0xf] %vm534, %v440
  %570 = vst.msk [vmem:[%s3 + $0x8c] sm:$0xf] %vm534, %v441
  %571 = vst.msk [vmem:[%s3 + $0x90] sm:$0xf] %vm534, %v442
  %572 = vst.msk [vmem:[%s3 + $0x94] sm:$0xf] %vm534, %v443
  %573 = vst.msk [vmem:[%s3 + $0x98] sm:$0xf] %vm534, %v444
  %574 = vst.msk [vmem:[%s3 + $0x9c] sm:$0xf] %vm534, %v445
  %575 = vst.msk [vmem:[%s3 + $0xa0] sm:$0xf] %vm534, %v446
  %576 = vst.msk [vmem:[%s3 + $0xa4] sm:$0xf] %vm534, %v447
  %577 = vst.msk [vmem:[%s3 + $0xa8] sm:$0xf] %vm534, %v448
  %578 = vst.msk [vmem:[%s3 + $0xac] sm:$0xf] %vm534, %v449
  %579 = vst.msk [vmem:[%s3 + $0xb0] sm:$0xf] %vm534, %v450
  %580 = vst.msk [vmem:[%s3 + $0xb4] sm:$0xf] %vm534, %v451
  %581 = vst.msk [vmem:[%s3 + $0xb8] sm:$0xf] %vm534, %v452
  %582 = vst.msk [vmem:[%s3 + $0xbc] sm:$0xf] %vm534, %v453
  %583 = vst.msk [vmem:[%s3 + $0xc0] sm:$0xf] %vm534, %v454
  %584 = vst.msk [vmem:[%s3 + $0xc4] sm:$0xf] %vm534, %v455
  %585 = vst.msk [vmem:[%s3 + $0xc8] sm:$0xf] %vm534, %v456
  %586 = vst.msk [vmem:[%s3 + $0xcc] sm:$0xf] %vm534, %v457
  %587 = vst.msk [vmem:[%s3 + $0xd0] sm:$0xf] %vm534, %v458
  %588 = vst.msk [vmem:[%s3 + $0xd4] sm:$0xf] %vm534, %v459
  %589 = vst.msk [vmem:[%s3 + $0xd8] sm:$0xf] %vm534, %v460
  %590 = vst.msk [vmem:[%s3 + $0xdc] sm:$0xf] %vm534, %v461
  %591 = vst.msk [vmem:[%s3 + $0xe0] sm:$0xf] %vm534, %v462
  %592 = vst.msk [vmem:[%s3 + $0xe4] sm:$0xf] %vm534, %v463
  %593 = vst.msk [vmem:[%s3 + $0xe8] sm:$0xf] %vm534, %v464
  %594 = vst.msk [vmem:[%s3 + $0xec] sm:$0xf] %vm534, %v465
  %595 = vst.msk [vmem:[%s3 + $0xf0] sm:$0xf] %vm534, %v466
  %596 = vst.msk [vmem:[%s3 + $0xf4] sm:$0xf] %vm534, %v467
  %597 = vst.msk [vmem:[%s3 + $0xf8] sm:$0xf] %vm534, %v468
  %598 = vst.msk [vmem:[%s3 + $0xfc] sm:$0xf] %vm534, %v469
  %599 = vst.msk [vmem:[%s3 + $0x100] sm:$0xf] %vm534, %v470
  %600 = vst.msk [vmem:[%s3 + $0x104] sm:$0xf] %vm534, %v471
  %601 = vst.msk [vmem:[%s3 + $0x108] sm:$0xf] %vm534, %v472
  %602 = vst.msk [vmem:[%s3 + $0x10c] sm:$0xf] %vm534, %v473
  %603 = vst.msk [vmem:[%s3 + $0x110] sm:$0xf] %vm534, %v474
  %604 = vst.msk [vmem:[%s3 + $0x114] sm:$0xf] %vm534, %v475
  %605 = vst.msk [vmem:[%s3 + $0x118] sm:$0xf] %vm534, %v476
  %606 = vst.msk [vmem:[%s3 + $0x11c] sm:$0xf] %vm534, %v477
  %607 = vst.msk [vmem:[%s3 + $0x120] sm:$0xf] %vm534, %v478
  %608 = vst.msk [vmem:[%s3 + $0x124] sm:$0xf] %vm534, %v479
  %609 = vst.msk [vmem:[%s3 + $0x128] sm:$0xf] %vm534, %v480
  %610 = vst.msk [vmem:[%s3 + $0x12c] sm:$0xf] %vm534, %v481
  %611 = vst.msk [vmem:[%s3 + $0x130] sm:$0xf] %vm534, %v482
  %612 = vst.msk [vmem:[%s3 + $0x134] sm:$0xf] %vm534, %v483
  %613 = vst.msk [vmem:[%s3 + $0x138] sm:$0xf] %vm534, %v484
  %614 = vst.msk [vmem:[%s3 + $0x13c] sm:$0xf] %vm534, %v485
  %615 = vst.msk [vmem:[%s3 + $0x140] sm:$0xf] %vm534, %v486
  %616 = vst.msk [vmem:[%s3 + $0x144] sm:$0xf] %vm534, %v487
  %617 = vst.msk [vmem:[%s3 + $0x148] sm:$0xf] %vm534, %v488
  %618 = vst.msk [vmem:[%s3 + $0x14c] sm:$0xf] %vm534, %v489
  %619 = vst.msk [vmem:[%s3 + $0x150] sm:$0xf] %vm534, %v490
  %620 = vst.msk [vmem:[%s3 + $0x154] sm:$0xf] %vm534, %v491
  %621 = vst.msk [vmem:[%s3 + $0x158] sm:$0xf] %vm534, %v492
  %622 = vst.msk [vmem:[%s3 + $0x15c] sm:$0xf] %vm534, %v493
  %623 = vst.msk [vmem:[%s3 + $0x160] sm:$0xf] %vm534, %v494
  %624 = vst.msk [vmem:[%s3 + $0x164] sm:$0xf] %vm534, %v495
  %625 = vst.msk [vmem:[%s3 + $0x168] sm:$0xf] %vm534, %v496
  %626 = vst.msk [vmem:[%s3 + $0x16c] sm:$0xf] %vm534, %v497
  %627 = vst.msk [vmem:[%s3 + $0x170] sm:$0xf] %vm534, %v498
  %628 = vst.msk [vmem:[%s3 + $0x174] sm:$0xf] %vm534, %v499
  %629 = vst.msk [vmem:[%s3 + $0x178] sm:$0xf] %vm534, %v500
  %630 = vst.msk [vmem:[%s3 + $0x17c] sm:$0xf] %vm534, %v501
  %631 = vst.msk [vmem:[%s3 + $0x180] sm:$0xf] %vm534, %v502
  %632 = vst.msk [vmem:[%s3 + $0x184] sm:$0xf] %vm534, %v503
  %633 = vst.msk [vmem:[%s3 + $0x188] sm:$0xf] %vm534, %v504
  %634 = vst.msk [vmem:[%s3 + $0x18c] sm:$0xf] %vm534, %v505
  %635 = vst.msk [vmem:[%s3 + $0x190] sm:$0xf] %vm534, %v506
  %636 = vst.msk [vmem:[%s3 + $0x194] sm:$0xf] %vm534, %v507
  %637 = vst.msk [vmem:[%s3 + $0x198] sm:$0xf] %vm534, %v508
  %638 = vst.msk [vmem:[%s3 + $0x19c] sm:$0xf] %vm534, %v509
  %639 = vst.msk [vmem:[%s3 + $0x1a0] sm:$0xf] %vm534, %v510
  %640 = vst.msk [vmem:[%s3 + $0x1a4] sm:$0xf] %vm534, %v511
  %641 = vst.msk [vmem:[%s3 + $0x1a8] sm:$0xf] %vm534, %v512
  %642 = vst.msk [vmem:[%s3 + $0x1ac] sm:$0xf] %vm534, %v513
  %643 = vst.msk [vmem:[%s3 + $0x1b0] sm:$0xf] %vm534, %v514
  %644 = vst.msk [vmem:[%s3 + $0x1b4] sm:$0xf] %vm534, %v515
  %645 = vst.msk [vmem:[%s3 + $0x1b8] sm:$0xf] %vm534, %v516
  %646 = vst.msk [vmem:[%s3 + $0x1bc] sm:$0xf] %vm534, %v517
  %647 = vst.msk [vmem:[%s3 + $0x1c0] sm:$0xf] %vm534, %v518
  %648 = vst.msk [vmem:[%s3 + $0x1c4] sm:$0xf] %vm534, %v519
  %649 = vst.msk [vmem:[%s3 + $0x1c8] sm:$0xf] %vm534, %v520
  %650 = vst.msk [vmem:[%s3 + $0x1cc] sm:$0xf] %vm534, %v521
  %651 = vst.msk [vmem:[%s3 + $0x1d0] sm:$0xf] %vm534, %v522
  %652 = vst.msk [vmem:[%s3 + $0x1d4] sm:$0xf] %vm534, %v523
  %653 = vst.msk [vmem:[%s3 + $0x1d8] sm:$0xf] %vm534, %v524
  %654 = vst.msk [vmem:[%s3 + $0x1dc] sm:$0xf] %vm534, %v525
  %655 = vst.msk [vmem:[%s3 + $0x1e0] sm:$0xf] %vm534, %v526
  %656 = vst.msk [vmem:[%s3 + $0x1e4] sm:$0xf] %vm534, %v527
  %657 = vst.msk [vmem:[%s3 + $0x1e8] sm:$0xf] %vm534, %v528
  %658 = vst.msk [vmem:[%s3 + $0x1ec] sm:$0xf] %vm534, %v529
  %659 = vst.msk [vmem:[%s3 + $0x1f0] sm:$0xf] %vm534, %v530
  %660 = vst.msk [vmem:[%s3 + $0x1f4] sm:$0xf] %vm534, %v531
  %661 = vst.msk [vmem:[%s3 + $0x1f8] sm:$0xf] %vm534, %v532
  %662 = vst.msk [vmem:[%s3 + $0x1fc] sm:$0xf] %vm534, %v533
  // Predicated region
  $region14: #{tpu_custom_call.1} parent=0 // pred_check
    _
  $region15: #{tpu_custom_call.1} parent=0 // pred_check_branch
    %664 = sbr.rel (0) target = $region17
  $region16: #{tpu_custom_call.1} parent=0 // pred_region
    _
  $region17: #{tpu_custom_call.1} parent=0 // pred_fallthru
    _
  // Predicated region
  $region18: #{tpu_custom_call.1} parent=0 // pred_check
    _
  $region19: #{tpu_custom_call.1} parent=0 // pred_check_branch
    %666 = sbr.rel (0) target = $region21
  $region20: #{tpu_custom_call.1} parent=0 // pred_region
    _
  $region21: #{tpu_custom_call.1} parent=0 // pred_fallthru
    _

</llo_original>
